<compile_context>
chip_gen: v5e
topology: v5e:2x2
jax: 0.10.0
libtpu: 0.0.40
codegen_flags: <defaults>
</compile_context>

<pallas_src>
import jax
import jax.numpy as jnp
from jax.experimental import pallas as pl
from jax.experimental.pallas import tpu as pltpu

ALPHA = 0.25
GAMMA = 2.0
LOGITS = True
REDUCE = False

_LANES = 128


def _round_up(n, m):
    return ((n + m - 1) // m) * m


def _focal_loss_kernel(x_ref, y_ref, o_ref):
    x = x_ref[...].astype(jnp.float32)
    y = y_ref[...].astype(jnp.float32)

    if LOGITS:
        # Numerically-stable BCE-with-logits (matches
        # F.binary_cross_entropy_with_logits, reduction='none'):
        #   bce = max(x, 0) - x*y + log1p(exp(-|x|))
        e = jnp.exp(-jnp.abs(x))
        bce = jnp.maximum(x, 0.0) - x * y + jnp.log1p(e)
    else:
        # plain BCE on probabilities (unused in the default config)
        eps = 1e-12
        xc = jnp.clip(x, eps, 1.0 - eps)
        bce = -(y * jnp.log(xc) + (1.0 - y) * jnp.log(1.0 - xc))

    pt = jnp.exp(-bce)
    one_minus_pt = 1.0 - pt
    if GAMMA == 2.0:
        focal_term = jnp.square(one_minus_pt)       # one VPU multiply, no pow
    else:
        focal_term = one_minus_pt ** GAMMA
    f_loss = ALPHA * focal_term * bce
    o_ref[...] = f_loss.astype(o_ref.dtype)


def focal_loss(inputs, targets, *, block_rows=4096):
    """Elementwise focal loss on tensors of any shape (e.g. NCHW)."""
    orig_shape = inputs.shape
    orig_dtype = inputs.dtype
    total = int(inputs.size)

    # Flatten to a lane-dense [rows, 128] slab, padding so that rows is a
    # multiple of the row tile (keeps bounded, pipelined tiles for any shape).
    rows = _round_up(total, _LANES) // _LANES
    block_rows = max(8, min(block_rows, _round_up(rows, 8)))
    padded_rows = _round_up(rows, block_rows)
    padded_total = padded_rows * _LANES

    x_flat = jnp.ravel(inputs)
    y_flat = jnp.ravel(targets)
    if padded_total != total:
        pad = padded_total - total
        x_flat = jnp.pad(x_flat, (0, pad))
        y_flat = jnp.pad(y_flat, (0, pad))
    x2d = x_flat.reshape(padded_rows, _LANES)
    y2d = y_flat.reshape(padded_rows, _LANES)

    grid = (padded_rows // block_rows,)

    out2d = pl.pallas_call(
        _focal_loss_kernel,
        out_shape=jax.ShapeDtypeStruct((padded_rows, _LANES), orig_dtype),
        grid_spec=pltpu.PrefetchScalarGridSpec(
            num_scalar_prefetch=0,
            grid=grid,
            in_specs=[
                pl.BlockSpec((block_rows, _LANES), lambda i: (i, 0)),
                pl.BlockSpec((block_rows, _LANES), lambda i: (i, 0)),
            ],
            out_specs=pl.BlockSpec((block_rows, _LANES), lambda i: (i, 0)),
        ),
        compiler_params=pltpu.CompilerParams(
            dimension_semantics=("parallel",),
        ),
    )(x2d, y2d)

    f_loss = out2d.reshape(-1)[:total].reshape(orig_shape)
    if REDUCE:
        return jnp.mean(f_loss)
    return f_loss


def _focal_loss_ref(inputs, targets):
    x = inputs.astype(jnp.float32)
    y = targets.astype(jnp.float32)
    bce = jnp.maximum(x, 0.0) - x * y + jnp.log1p(jnp.exp(-jnp.abs(x)))
    pt = jnp.exp(-bce)
    return ALPHA * (1.0 - pt) ** GAMMA * bce


if __name__ == "__main__":
    key = jax.random.PRNGKey(0)
    k1, k2 = jax.random.split(key)
    # NCHW inputs, as PyTorch would see them.
    N, C, H, W = 2, 4, 16, 16
    inputs = jax.random.normal(k1, (N, C, H, W), dtype=jnp.float32)
    targets = (jax.random.uniform(k2, (N, C, H, W)) > 0.5).astype(jnp.float32)

    out = focal_loss(inputs, targets)
    out = jax.block_until_ready(out)

    ref = _focal_loss_ref(inputs, targets)
    assert out.shape == (N, C, H, W)
    assert jnp.allclose(out, ref, atol=1e-5, rtol=1e-5)

    # Also exercise a shape whose element count is NOT a multiple of 128 or the
    # row tile, to cover the padding path.
    xs = jax.random.normal(k1, (3, 5, 7), dtype=jnp.float32)
    ys = (jax.random.uniform(k2, (3, 5, 7)) > 0.5).astype(jnp.float32)
    out2 = jax.block_until_ready(focal_loss(xs, ys))
    assert out2.shape == (3, 5, 7)
    assert jnp.allclose(out2, _focal_loss_ref(xs, ys), atol=1e-5, rtol=1e-5)

    print("KERNEL_OK")
</pallas_src>

<mosaic_0001>
module attributes {stable_mosaic.version = 11 : i64} {
  func.func @_focal_loss_kernel(%arg0: i32, %arg1: memref<16x128xf32, #tpu.memory_space<vmem>>, %arg2: memref<16x128xf32, #tpu.memory_space<vmem>>, %arg3: memref<16x128xf32, #tpu.memory_space<vmem>>) attributes {dimension_semantics = [#tpu.dimension_semantics<parallel>], iteration_bounds = array<i64: 1>, scalar_prefetch = 0 : i64, scratch_operands = 0 : i64, tpu.core_type = #tpu.core_type<tc>, window_params = [{transform_indices = @transform_0, window_bounds = array<i64: 16, 128>}, {transform_indices = @transform_1, window_bounds = array<i64: 16, 128>}, {transform_indices = @transform_2, window_bounds = array<i64: 16, 128>}]} {
    %c0 = arith.constant 0 : index
    %c0_0 = arith.constant 0 : index
    %0 = vector.load %arg1[%c0, %c0_0] : memref<16x128xf32, #tpu.memory_space<vmem>>, vector<16x128xf32>
    %c0_1 = arith.constant 0 : index
    %c0_2 = arith.constant 0 : index
    %1 = vector.load %arg2[%c0_1, %c0_2] : memref<16x128xf32, #tpu.memory_space<vmem>>, vector<16x128xf32>
    %2 = math.absf %0 : vector<16x128xf32>
    %cst = arith.constant 0.000000e+00 : f32
    %3 = vector.broadcast %cst : f32 to vector<16x128xf32>
    %4 = arith.subf %3, %2 : vector<16x128xf32>
    %5 = math.exp %4 : vector<16x128xf32>
    %cst_3 = arith.constant 0.000000e+00 : f32
    %6 = vector.broadcast %cst_3 : f32 to vector<16x128xf32>
    %7 = arith.maximumf %0, %6 : vector<16x128xf32>
    %8 = arith.mulf %0, %1 : vector<16x128xf32>
    %9 = arith.subf %7, %8 : vector<16x128xf32>
    %10 = math.log1p %5 : vector<16x128xf32>
    %11 = arith.addf %9, %10 : vector<16x128xf32>
    %cst_4 = arith.constant 0.000000e+00 : f32
    %12 = vector.broadcast %cst_4 : f32 to vector<16x128xf32>
    %13 = arith.subf %12, %11 : vector<16x128xf32>
    %14 = math.exp %13 : vector<16x128xf32>
    %cst_5 = arith.constant 1.000000e+00 : f32
    %15 = vector.broadcast %cst_5 : f32 to vector<16x128xf32>
    %16 = arith.subf %15, %14 : vector<16x128xf32>
    %17 = arith.mulf %16, %16 : vector<16x128xf32>
    %cst_6 = arith.constant 2.500000e-01 : f32
    %18 = vector.broadcast %cst_6 : f32 to vector<16x128xf32>
    %19 = arith.mulf %18, %17 : vector<16x128xf32>
    %20 = arith.mulf %19, %11 : vector<16x128xf32>
    %c0_7 = arith.constant 0 : index
    %c0_8 = arith.constant 0 : index
    %21 = vector.load %arg3[%c0_7, %c0_8] : memref<16x128xf32, #tpu.memory_space<vmem>>, vector<16x128xf32>
    tpu.vector_store %arg3[%c0_7, %c0_8], %20 {strides = array<i32>} : memref<16x128xf32, #tpu.memory_space<vmem>>, vector<16x128xf32>,
    return
  }
  func.func @transform_0(%arg0: i32) -> (i32, i32) {
    %c0_i32 = arith.constant 0 : i32
    %c0_i32_0 = arith.constant 0 : i32
    return %arg0, %c0_i32 : i32, i32
  }
  func.func @transform_1(%arg0: i32) -> (i32, i32) {
    %c0_i32 = arith.constant 0 : i32
    %c0_i32_0 = arith.constant 0 : i32
    return %arg0, %c0_i32 : i32, i32
  }
  func.func @transform_2(%arg0: i32) -> (i32, i32) {
    %c0_i32 = arith.constant 0 : i32
    %c0_i32_0 = arith.constant 0 : i32
    return %arg0, %c0_i32 : i32, i32
  }
}

</mosaic_0001>

<llo_original>
// kernel: tpu_custom_call.1
$region0: #{tpu_custom_call.1}
  #allocation0 [shape = 'u32[]', space=smem, size = 0x4, offset = 0x4, fixed_abs, tag = 'smem constant byte address 0x4 - core index']
  #allocation1 [shape = 'u32[72,128]{1,0:T(1,128)}', space=vmem, size = 0x9000, scoped, tag = 'internal scratch']
  %s0 = inlined_call_operand.hbm [shape: f32[16,128], index: 0, kind: input, shape index: {}]
  %s1 = inlined_call_operand.hbm [shape: f32[16,128], index: 1, kind: input, shape index: {}]
  %s2 = inlined_call_operand.hbm [shape: f32[16,128], index: 2, kind: output, shape index: {}]
  %s3 = sld [smem:[#allocation0]]
  $region26: #{tpu_custom_call.1} parent=0
    _
  %s5 = ssub.s32 1, %s3
  %s6 = scalar_select 0, %s5, %s3
  $region1: #{tpu_custom_call.1} parent=0
    #allocation2 [shape = 'u8[8192]{0}', space=vmem, size = 0x2000, scoped, tag = 'input window, operand 0, single buffered']
    #allocation3 [shape = 's32[1]{0}', space=sflag, size = 0x4, scoped, tag = 'scoped memory for tpu_custom_call.1']
    #allocation4 [shape = 's32[1]{0}', space=sflag, size = 0x4, scoped, tag = 'scoped memory for tpu_custom_call.1']
    #allocation5 [shape = 'u8[8192]{0}', space=vmem, size = 0x2000, scoped, tag = 'input window, operand 1, single buffered']
    #allocation6 [shape = 's32[1]{0}', space=sflag, size = 0x4, scoped, tag = 'scoped memory for tpu_custom_call.1']
    #allocation7 [shape = 'u8[8192]{0}', space=vmem, size = 0x2000, scoped, tag = 'output window, operand 0, single buffered']
    %7 = vsyncpa [#allocation3], 0
    %8 = vsyncpa [#allocation6], 0
    %9 = vsyncpa [#allocation4], 0
    // Predicated region
    $region2: #{tpu_custom_call.1} parent=1 // pred_check
      _
    $region3: #{tpu_custom_call.1} parent=1 // pred_check_branch
      %11 = sbr.rel (0) target = $region5
    $region4: #{tpu_custom_call.1} parent=1 // pred_region
      %13 = vsyncadd [#allocation3], 0
      %s14 = sshll.u32 %s0, 4
      %s15 = int_to_ptr.hbm [resolvable:$true] %s14
      %s16 = sshll.u32 [#allocation2], 4
      %s17 = int_to_ptr.vmem [resolvable:$true] %s16
      %22 = dma.hbm_to_vmem [thread:$0]  %s15, 256, %s17, [#allocation3], 128, 128, 8
    $region5: #{tpu_custom_call.1} parent=1 // pred_fallthru
      _
    // Predicated region
    $region6: #{tpu_custom_call.1} parent=1 // pred_check
      _
    $region7: #{tpu_custom_call.1} parent=1 // pred_check_branch
      %24 = sbr.rel (0) target = $region9
    $region8: #{tpu_custom_call.1} parent=1 // pred_region
      %26 = vsyncadd [#allocation6], 0
      %s27 = sshll.u32 %s1, 4
      %s28 = int_to_ptr.hbm [resolvable:$true] %s27
      %s29 = sshll.u32 [#allocation5], 4
      %s30 = int_to_ptr.vmem [resolvable:$true] %s29
      %35 = dma.hbm_to_vmem [thread:$0]  %s28, 256, %s30, [#allocation6], 128, 128, 8
    $region9: #{tpu_custom_call.1} parent=1 // pred_fallthru
      _
    // Predicated region
    $region10: #{tpu_custom_call.1} parent=1 // pred_check
      _
    $region11: #{tpu_custom_call.1} parent=1 // pred_check_branch
      %37 = sbr.rel (0) target = $region13
    $region12: #{tpu_custom_call.1} parent=1 // pred_region
      %39 = dma.done [#allocation3], 256
    $region13: #{tpu_custom_call.1} parent=1 // pred_fallthru
      _
    // Predicated region
    $region14: #{tpu_custom_call.1} parent=1 // pred_check
      _
    $region15: #{tpu_custom_call.1} parent=1 // pred_check_branch
      %41 = sbr.rel (0) target = $region17
    $region16: #{tpu_custom_call.1} parent=1 // pred_region
      %43 = dma.done [#allocation6], 256
    $region17: #{tpu_custom_call.1} parent=1 // pred_fallthru
      _
    %v44 = vld [vmem:[#allocation2] sm:$0xff]
    %v45 = vld [vmem:[#allocation2 + $0x8] sm:$0xff]
    %v46 = vld [vmem:[#allocation5] sm:$0xff]
    %v47 = vld [vmem:[#allocation5 + $0x8] sm:$0xff]
    %v48 = vand.u32 2147483647, %v44
    %v49 = vand.u32 2147483647, %v45
    %v50 = vsub.f32 0.0, %v48
    %v51 = vsub.f32 0.0, %v49
    %v52 = vmul.f32 %v50, 1.442695
    %v53 = vpow.pop %v52
    %v54 = vmul.f32 %v51, 1.442695
    %v55 = vpow.pop %v54
    %v56 = vmax.f32 %v44, 0.0
    %v57 = vmax.f32 %v45, 0.0
    %v58 = vmul.f32 %v44, %v46
    %v59 = vmul.f32 %v45, %v47
    %v60 = vsub.f32 %v56, %v58
    %v61 = vsub.f32 %v57, %v59
    %v62 = vadd.f32 %v53, 1.0
    %v63 = vlog2.pop %v62
    %v64 = vmul.f32 %v63, 0.6931472
    %v65 = vmul.f32 -0.5, %v53
    %v66 = vadd.f32 %v65, 1.0
    %v67 = vmul.f32 %v66, %v53
    %v68 = vand.u32 2147483647, %v53
    %vm69 = vcmp.lt.f32.partialorder %v68, 0.0004427343
    %v70 = vsel %vm69, %v67, %v64
    %v71 = vadd.f32 %v55, 1.0
    %v72 = vlog2.pop %v71
    %v73 = vmul.f32 %v72, 0.6931472
    %v74 = vmul.f32 -0.5, %v55
    %v75 = vadd.f32 %v74, 1.0
    %v76 = vmul.f32 %v75, %v55
    %v77 = vand.u32 2147483647, %v55
    %vm78 = vcmp.lt.f32.partialorder %v77, 0.0004427343
    %v79 = vsel %vm78, %v76, %v73
    %v80 = vadd.f32 %v60, %v70
    %v81 = vadd.f32 %v61, %v79
    %v82 = vsub.f32 0.0, %v80
    %v83 = vsub.f32 0.0, %v81
    %v84 = vmul.f32 %v82, 1.442695
    %v85 = vpow.pop %v84
    %v86 = vmul.f32 %v83, 1.442695
    %v87 = vpow.pop %v86
    %v88 = vsub.f32 1.0, %v85
    %v89 = vsub.f32 1.0, %v87
    %v90 = vmul.f32 %v88, %v88
    %v91 = vmul.f32 %v89, %v89
    %v92 = vmul.f32 %v90, 0.25
    %v93 = vmul.f32 %v91, 0.25
    %v94 = vmul.f32 %v92, %v80
    %v95 = vmul.f32 %v93, %v81
    %96 = vst [vmem:[#allocation7] sm:$0xff] %v94
    %97 = vst [vmem:[#allocation7 + $0x8] sm:$0xff] %v95
    // Predicated region
    $region18: #{tpu_custom_call.1} parent=1 // pred_check
      _
    $region19: #{tpu_custom_call.1} parent=1 // pred_check_branch
      %99 = sbr.rel (0) target = $region21
    $region20: #{tpu_custom_call.1} parent=1 // pred_region
      %101 = vsyncadd [#allocation4], 0
      %s102 = sshll.u32 [#allocation7], 4
      %s103 = int_to_ptr.vmem [resolvable:$true] %s102
      %s104 = sshll.u32 %s2, 4
      %s105 = int_to_ptr.hbm [resolvable:$true] %s104
      %110 = dma.vmem_to_hbm [thread:$0]  %s103, 256, %s105, [#allocation4], 128, 128, 8
    $region21: #{tpu_custom_call.1} parent=1 // pred_fallthru
      _
    // Predicated region
    $region22: #{tpu_custom_call.1} parent=1 // pred_check
      _
    $region23: #{tpu_custom_call.1} parent=1 // pred_check_branch
      %112 = sbr.rel (0) target = $region25
    $region24: #{tpu_custom_call.1} parent=1 // pred_region
      %114 = dma.done [#allocation4], 256
    $region25: #{tpu_custom_call.1} parent=1 // pred_fallthru
      _
    %115 = vsyncpa [#allocation3], 1
    %116 = vsyncpa [#allocation6], 1
    %117 = vsyncpa [#allocation4], 1

</llo_original>
